<compile_context>
chip_gen: v6e
topology: v6e:2x2x1
jax: 0.10.0
libtpu: 0.0.40
codegen_flags: <defaults>
</compile_context>

<pallas_src>
import functools

import jax
import jax.numpy as jnp
from jax.experimental import pallas as pl
from jax.experimental.pallas import tpu as pltpu

# ----------------------------- config ---------------------------------------
Z_DIM = 8
H_DIM = 32
OUT_DIM = 8
LOG_VAR_INI = -2.0
LOG_VAR_MIN = -6.0
DEFAULT_TILE_N = 16384   # lane-dense tiles: ~3.5 MiB double-buffered @ this size


def _round_up(x, m):
    return ((x + m - 1) // m) * m


def _cdiv(a, b):
    return (a + b - 1) // b


def _choose_tiling(n, tile_n):
    """Pick (tile, num_tiles, n_pad) with tile % 128 == 0, tile*num_tiles == n_pad >= n,
    padding bounded by 128*num_tiles (never a whole dead tile), and >= 2 tiles when
    there is enough work (v7x dual-TensorCore occupancy)."""
    n128 = _round_up(max(n, 1), 128)
    tile = _round_up(min(tile_n, n128), 128)
    num_tiles = _cdiv(n128, tile)
    if num_tiles == 1 and n128 >= 256:
        num_tiles = 2
    tile = _round_up(_cdiv(n128, num_tiles), 128)
    n_pad = tile * num_tiles
    return tile, num_tiles, n_pad


# ----------------------------- kernel ---------------------------------------
def simi_kernel(zT_ref,                        # (Z_DIM, TILE_N)   bf16
                eps_ref,                       # (OUT_DIM, TILE_N) f32
                w1_ref, b1_ref,                # (H_DIM, Z_DIM) bf16, (H_DIM, 1) f32
                w2_ref, b2_ref,                # (H_DIM, H_DIM) bf16, (H_DIM, 1) f32
                w3_ref, b3_ref,                # (OUT_DIM, H_DIM) bf16, (OUT_DIM, 1) f32
                std_ref, inv_std_ref,          # (OUT_DIM, 1) f32 each
                out_ref):                      # (2*OUT_DIM, TILE_N) f32 = [X^T ; neg^T]
    # mu^T = MLP(Z)^T.  Small stationary bf16 weights are the LHS; the
    # (K, TILE_N) bf16 activation streams through the MXU; accumulate in f32.
    zT = zT_ref[...]
    h = jnp.dot(w1_ref[...], zT, preferred_element_type=jnp.float32)
    h = jnp.maximum(h + b1_ref[...], 0.0)
    h = jnp.dot(w2_ref[...], h.astype(jnp.bfloat16),
                preferred_element_type=jnp.float32)
    h = jnp.maximum(h + b2_ref[...], 0.0)
    mu = jnp.dot(w3_ref[...], h.astype(jnp.bfloat16),
                 preferred_element_type=jnp.float32) + b3_ref[...]

    # Reparameterize in f32: X = mu + std*eps, neg_score_implicit = eps / std.
    # std / inv_std come precomputed from clamp(log_var) in the wrapper.
    eps = eps_ref[...]
    out_ref[0:OUT_DIM, :] = mu + std_ref[...] * eps
    out_ref[OUT_DIM:2 * OUT_DIM, :] = eps * inv_std_ref[...]


# ----------------------------- wrappers --------------------------------------
@functools.partial(jax.jit, static_argnames=("tile_n",))
def simi_forward_feature_major(zT, params, key, tile_n=DEFAULT_TILE_N):
    """Feature-major entry (no layout glue).

    zT: (Z_DIM, N).  Returns stacked (2*OUT_DIM, N) f32:
      rows [0:OUT_DIM)        = X^T
      rows [OUT_DIM:2*OUT_DIM) = neg_score_implicit^T
    """
    n = zT.shape[1]
    w1, b1, w2, b2, w3, b3, log_var = params

    # Hoisted clamp(log_var) + exp -- tiny (OUT_DIM,), once per call.
    lv = jnp.maximum(log_var, LOG_VAR_MIN)
    std = jnp.exp(0.5 * lv).reshape(OUT_DIM, 1).astype(jnp.float32)
    inv_std = jnp.exp(-0.5 * lv).reshape(OUT_DIM, 1).astype(jnp.float32)

    tile, num_tiles, n_pad = _choose_tiling(n, tile_n)

    zT_p = jnp.pad(zT.astype(jnp.bfloat16), ((0, 0), (0, n_pad - n)))
    # TODO(synk): eps stream is jax.random.normal, not bit-exact with torch.randn.
    eps = jax.random.normal(key, (OUT_DIM, n_pad), dtype=jnp.float32)

    const = lambda shape: pl.BlockSpec(shape, lambda i: (0, 0))
    tiled = lambda shape: pl.BlockSpec(shape, lambda i: (0, i))

    out = pl.pallas_call(
        simi_kernel,
        out_shape=jax.ShapeDtypeStruct((2 * OUT_DIM, n_pad), jnp.float32),
        grid_spec=pltpu.PrefetchScalarGridSpec(
            num_scalar_prefetch=0,
            grid=(num_tiles,),
            in_specs=[
                tiled((Z_DIM, tile)),        # Z^T (bf16)
                tiled((OUT_DIM, tile)),      # eps^T (f32)
                const((H_DIM, Z_DIM)),       # w1 (bf16)
                const((H_DIM, 1)),           # b1
                const((H_DIM, H_DIM)),       # w2 (bf16)
                const((H_DIM, 1)),           # b2
                const((OUT_DIM, H_DIM)),     # w3 (bf16)
                const((OUT_DIM, 1)),         # b3
                const((OUT_DIM, 1)),         # std
                const((OUT_DIM, 1)),         # inv_std
            ],
            out_specs=tiled((2 * OUT_DIM, tile)),   # stacked [X^T ; neg^T]
        ),
        compiler_params=pltpu.CompilerParams(
            dimension_semantics=("parallel",)),     # batch tiles across TCs (v7x)
    )(zT_p, eps,
      w1.astype(jnp.bfloat16), b1.reshape(H_DIM, 1).astype(jnp.float32),
      w2.astype(jnp.bfloat16), b2.reshape(H_DIM, 1).astype(jnp.float32),
      w3.astype(jnp.bfloat16), b3.reshape(OUT_DIM, 1).astype(jnp.float32),
      std, inv_std)

    return out[:, :n]


@functools.partial(jax.jit, static_argnames=("tile_n",))
def simi_forward(Z, params, key, tile_n=DEFAULT_TILE_N):
    """Torch-compatible entry.  Z: (N, z_dim) f32.
    Returns (X, neg_score_implicit), each (N, out_dim).

    NOTE: the Z.T / output transposes here are pure layout glue; batch-heavy
    callers should use simi_forward_feature_major and keep feature-major
    layout end to end.
    """
    out = simi_forward_feature_major(Z.T, params, key, tile_n=tile_n)
    X = out[:OUT_DIM, :].T
    neg = out[OUT_DIM:, :].T
    return X, neg


# ----------------------------- params / reference ----------------------------
def init_params(key):
    """torch.nn.Linear-style init: U(+/- 1/sqrt(fan_in)); weights are (out, in)."""
    k1, k2, k3, k4, k5, k6 = jax.random.split(key, 6)

    def lin(kw, kb, fan_in, fan_out):
        bound = 1.0 / jnp.sqrt(fan_in)
        w = jax.random.uniform(kw, (fan_out, fan_in), jnp.float32, -bound, bound)
        b = jax.random.uniform(kb, (fan_out,), jnp.float32, -bound, bound)
        return w, b

    w1, b1 = lin(k1, k2, Z_DIM, H_DIM)
    w2, b2 = lin(k3, k4, H_DIM, H_DIM)
    w3, b3 = lin(k5, k6, H_DIM, OUT_DIM)
    log_var = jnp.full((OUT_DIM,), LOG_VAR_INI, dtype=jnp.float32)
    return (w1, b1, w2, b2, w3, b3, log_var)


def reference_mu(Z, params):
    w1, b1, w2, b2, w3, b3, _ = params
    h = jnp.maximum(Z @ w1.T + b1, 0.0)
    h = jnp.maximum(h @ w2.T + b2, 0.0)
    return h @ w3.T + b3


# ----------------------------- test -----------------------------------------
if __name__ == "__main__":
    key = jax.random.PRNGKey(0)
    kp, kz, ke = jax.random.split(key, 3)

    N = 300  # non-multiple of 128 -> exercises the 128-padded tail + 2 tiles
    params = init_params(kp)
    Z = jax.random.normal(kz, (N, Z_DIM), dtype=jnp.float32)

    X, neg = simi_forward(Z, params, ke)
    jax.block_until_ready((X, neg))

    assert X.shape == (N, OUT_DIM) and neg.shape == (N, OUT_DIM)
    assert bool(jnp.all(jnp.isfinite(X))) and bool(jnp.all(jnp.isfinite(neg)))

    # eps is drawn in the wrapper (different RNG stream than torch), so verify
    # the reparameterization algebra instead:
    #   X - var * neg = mu + std*eps - std^2 * (eps/std) = mu
    # which simultaneously checks the MLP (mu), clamp(log_var), std, and 1/std.
    log_var = params[-1]
    var = jnp.exp(jnp.maximum(log_var, LOG_VAR_MIN))          # (OUT_DIM,)
    mu_from_kernel = X - var * neg
    mu_ref = reference_mu(Z, params)
    # bf16 MXU operands with f32 accumulation -> ~3 decimal digits on mu.
    assert jnp.allclose(mu_from_kernel, mu_ref, atol=3e-2, rtol=3e-2), "mu mismatch"

    print("KERNEL_OK")
</pallas_src>

<mosaic_0001>
module attributes {stable_mosaic.version = 11 : i64} {
  func.func @simi_kernel(%arg0: i32, %arg1: memref<8x256xbf16, #tpu.memory_space<vmem>>, %arg2: memref<8x256xf32, #tpu.memory_space<vmem>>, %arg3: memref<32x8xbf16, #tpu.memory_space<vmem>>, %arg4: memref<32x1xf32, #tpu.memory_space<vmem>>, %arg5: memref<32x32xbf16, #tpu.memory_space<vmem>>, %arg6: memref<32x1xf32, #tpu.memory_space<vmem>>, %arg7: memref<8x32xbf16, #tpu.memory_space<vmem>>, %arg8: memref<8x1xf32, #tpu.memory_space<vmem>>, %arg9: memref<8x1xf32, #tpu.memory_space<vmem>>, %arg10: memref<8x1xf32, #tpu.memory_space<vmem>>, %arg11: memref<16x256xf32, #tpu.memory_space<vmem>>) attributes {dimension_semantics = [#tpu.dimension_semantics<parallel>], iteration_bounds = array<i64: 2>, scalar_prefetch = 0 : i64, scratch_operands = 0 : i64, tpu.core_type = #tpu.core_type<tc>, window_params = [{transform_indices = @transform_0, window_bounds = array<i64: 8, 256>}, {transform_indices = @transform_1, window_bounds = array<i64: 8, 256>}, {pipeline_mode = #tpu.pipeline_mode<synchronous>, transform_indices = @transform_2, window_bounds = array<i64: 32, 8>}, {pipeline_mode = #tpu.pipeline_mode<synchronous>, transform_indices = @transform_3, window_bounds = array<i64: 32, 1>}, {pipeline_mode = #tpu.pipeline_mode<synchronous>, transform_indices = @transform_4, window_bounds = array<i64: 32, 32>}, {pipeline_mode = #tpu.pipeline_mode<synchronous>, transform_indices = @transform_5, window_bounds = array<i64: 32, 1>}, {pipeline_mode = #tpu.pipeline_mode<synchronous>, transform_indices = @transform_6, window_bounds = array<i64: 8, 32>}, {pipeline_mode = #tpu.pipeline_mode<synchronous>, transform_indices = @transform_7, window_bounds = array<i64: 8, 1>}, {pipeline_mode = #tpu.pipeline_mode<synchronous>, transform_indices = @transform_8, window_bounds = array<i64: 8, 1>}, {pipeline_mode = #tpu.pipeline_mode<synchronous>, transform_indices = @transform_9, window_bounds = array<i64: 8, 1>}, {transform_indices = @transform_10, window_bounds = array<i64: 16, 256>}]} {
    %c0 = arith.constant 0 : index
    %c0_0 = arith.constant 0 : index
    %0 = vector.load %arg1[%c0, %c0_0] : memref<8x256xbf16, #tpu.memory_space<vmem>>, vector<8x256xbf16>
    %c0_1 = arith.constant 0 : index
    %c0_2 = arith.constant 0 : index
    %1 = vector.load %arg3[%c0_1, %c0_2] : memref<32x8xbf16, #tpu.memory_space<vmem>>, vector<32x8xbf16>
    %cst = arith.constant dense<0.000000e+00> : vector<32x256xf32>
    %2 = tpu.matmul %1, %0, %cst {dimension_numbers = #tpu.dot_dimension_numbers<[1], [0], [0], [1], [0, 0, 1, 1], [], []>} : vector<32x8xbf16>, vector<8x256xbf16>, vector<32x256xf32> -> vector<32x256xf32>
    %c0_3 = arith.constant 0 : index
    %c0_4 = arith.constant 0 : index
    %3 = vector.load %arg4[%c0_3, %c0_4] : memref<32x1xf32, #tpu.memory_space<vmem>>, vector<32x1xf32>
    %4 = vector.broadcast %3 : vector<32x1xf32> to vector<32x256xf32>
    %5 = arith.addf %2, %4 : vector<32x256xf32>
    %cst_5 = arith.constant 0.000000e+00 : f32
    %6 = vector.broadcast %cst_5 : f32 to vector<32x256xf32>
    %7 = arith.maximumf %5, %6 : vector<32x256xf32>
    %c0_6 = arith.constant 0 : index
    %c0_7 = arith.constant 0 : index
    %8 = vector.load %arg5[%c0_6, %c0_7] : memref<32x32xbf16, #tpu.memory_space<vmem>>, vector<32x32xbf16>
    %9 = arith.truncf %7 : vector<32x256xf32> to vector<32x256xbf16>
    %cst_8 = arith.constant dense<0.000000e+00> : vector<32x256xf32>
    %10 = tpu.matmul %8, %9, %cst_8 {dimension_numbers = #tpu.dot_dimension_numbers<[1], [0], [0], [1], [0, 0, 1, 1], [], []>} : vector<32x32xbf16>, vector<32x256xbf16>, vector<32x256xf32> -> vector<32x256xf32>
    %c0_9 = arith.constant 0 : index
    %c0_10 = arith.constant 0 : index
    %11 = vector.load %arg6[%c0_9, %c0_10] : memref<32x1xf32, #tpu.memory_space<vmem>>, vector<32x1xf32>
    %12 = vector.broadcast %11 : vector<32x1xf32> to vector<32x256xf32>
    %13 = arith.addf %10, %12 : vector<32x256xf32>
    %cst_11 = arith.constant 0.000000e+00 : f32
    %14 = vector.broadcast %cst_11 : f32 to vector<32x256xf32>
    %15 = arith.maximumf %13, %14 : vector<32x256xf32>
    %c0_12 = arith.constant 0 : index
    %c0_13 = arith.constant 0 : index
    %16 = vector.load %arg7[%c0_12, %c0_13] : memref<8x32xbf16, #tpu.memory_space<vmem>>, vector<8x32xbf16>
    %17 = arith.truncf %15 : vector<32x256xf32> to vector<32x256xbf16>
    %cst_14 = arith.constant dense<0.000000e+00> : vector<8x256xf32>
    %18 = tpu.matmul %16, %17, %cst_14 {dimension_numbers = #tpu.dot_dimension_numbers<[1], [0], [0], [1], [0, 0, 1, 1], [], []>} : vector<8x32xbf16>, vector<32x256xbf16>, vector<8x256xf32> -> vector<8x256xf32>
    %c0_15 = arith.constant 0 : index
    %c0_16 = arith.constant 0 : index
    %19 = vector.load %arg8[%c0_15, %c0_16] : memref<8x1xf32, #tpu.memory_space<vmem>>, vector<8x1xf32>
    %20 = vector.broadcast %19 : vector<8x1xf32> to vector<8x256xf32>
    %21 = arith.addf %18, %20 : vector<8x256xf32>
    %c0_17 = arith.constant 0 : index
    %c0_18 = arith.constant 0 : index
    %22 = vector.load %arg2[%c0_17, %c0_18] : memref<8x256xf32, #tpu.memory_space<vmem>>, vector<8x256xf32>
    %c0_19 = arith.constant 0 : index
    %c0_20 = arith.constant 0 : index
    %23 = vector.load %arg9[%c0_19, %c0_20] : memref<8x1xf32, #tpu.memory_space<vmem>>, vector<8x1xf32>
    %24 = vector.broadcast %23 : vector<8x1xf32> to vector<8x256xf32>
    %25 = arith.mulf %24, %22 : vector<8x256xf32>
    %26 = arith.addf %21, %25 : vector<8x256xf32>
    %c0_21 = arith.constant 0 : index
    %c0_22 = arith.constant 0 : index
    %27 = vector.load %arg11[%c0_21, %c0_22] : memref<16x256xf32, #tpu.memory_space<vmem>>, vector<8x256xf32>
    tpu.vector_store %arg11[%c0_21, %c0_22], %26 {strides = array<i32>} : memref<16x256xf32, #tpu.memory_space<vmem>>, vector<8x256xf32>,
    %c0_23 = arith.constant 0 : index
    %c0_24 = arith.constant 0 : index
    %28 = vector.load %arg10[%c0_23, %c0_24] : memref<8x1xf32, #tpu.memory_space<vmem>>, vector<8x1xf32>
    %29 = vector.broadcast %28 : vector<8x1xf32> to vector<8x256xf32>
    %30 = arith.mulf %22, %29 : vector<8x256xf32>
    %c8 = arith.constant 8 : index
    %c0_25 = arith.constant 0 : index
    %31 = vector.load %arg11[%c8, %c0_25] : memref<16x256xf32, #tpu.memory_space<vmem>>, vector<8x256xf32>
    tpu.vector_store %arg11[%c8, %c0_25], %30 {strides = array<i32>} : memref<16x256xf32, #tpu.memory_space<vmem>>, vector<8x256xf32>,
    return
  }
  func.func @transform_0(%arg0: i32) -> (i32, i32) {
    %c0_i32 = arith.constant 0 : i32
    %c0_i32_0 = arith.constant 0 : i32
    return %c0_i32, %arg0 : i32, i32
  }
  func.func @transform_1(%arg0: i32) -> (i32, i32) {
    %c0_i32 = arith.constant 0 : i32
    %c0_i32_0 = arith.constant 0 : i32
    return %c0_i32, %arg0 : i32, i32
  }
  func.func @transform_2(%arg0: i32) -> (i32, i32) {
    %c0_i32 = arith.constant 0 : i32
    %c0_i32_0 = arith.constant 0 : i32
    %c0_i32_1 = arith.constant 0 : i32
    return %c0_i32, %c0_i32_0 : i32, i32
  }
  func.func @transform_3(%arg0: i32) -> (i32, i32) {
    %c0_i32 = arith.constant 0 : i32
    %c0_i32_0 = arith.constant 0 : i32
    %c0_i32_1 = arith.constant 0 : i32
    return %c0_i32, %c0_i32_0 : i32, i32
  }
  func.func @transform_4(%arg0: i32) -> (i32, i32) {
    %c0_i32 = arith.constant 0 : i32
    %c0_i32_0 = arith.constant 0 : i32
    %c0_i32_1 = arith.constant 0 : i32
    return %c0_i32, %c0_i32_0 : i32, i32
  }
  func.func @transform_5(%arg0: i32) -> (i32, i32) {
    %c0_i32 = arith.constant 0 : i32
    %c0_i32_0 = arith.constant 0 : i32
    %c0_i32_1 = arith.constant 0 : i32
    return %c0_i32, %c0_i32_0 : i32, i32
  }
  func.func @transform_6(%arg0: i32) -> (i32, i32) {
    %c0_i32 = arith.constant 0 : i32
    %c0_i32_0 = arith.constant 0 : i32
    %c0_i32_1 = arith.constant 0 : i32
    return %c0_i32, %c0_i32_0 : i32, i32
  }
  func.func @transform_7(%arg0: i32) -> (i32, i32) {
    %c0_i32 = arith.constant 0 : i32
    %c0_i32_0 = arith.constant 0 : i32
    %c0_i32_1 = arith.constant 0 : i32
    return %c0_i32, %c0_i32_0 : i32, i32
  }
  func.func @transform_8(%arg0: i32) -> (i32, i32) {
    %c0_i32 = arith.constant 0 : i32
    %c0_i32_0 = arith.constant 0 : i32
    %c0_i32_1 = arith.constant 0 : i32
    return %c0_i32, %c0_i32_0 : i32, i32
  }
  func.func @transform_9(%arg0: i32) -> (i32, i32) {
    %c0_i32 = arith.constant 0 : i32
    %c0_i32_0 = arith.constant 0 : i32
    %c0_i32_1 = arith.constant 0 : i32
    return %c0_i32, %c0_i32_0 : i32, i32
  }
  func.func @transform_10(%arg0: i32) -> (i32, i32) {
    %c0_i32 = arith.constant 0 : i32
    %c0_i32_0 = arith.constant 0 : i32
    return %c0_i32, %arg0 : i32, i32
  }
}

</mosaic_0001>

<llo_original>
// kernel: simi_forward_feature_major.1
$region0: #{simi_forward_feature_major.1}
  #allocation0 [shape = 'u32[]', space=smem, size = 0x4, offset = 0x4, fixed_abs, tag = 'smem constant byte address 0x4 - core index']
  #allocation1 [shape = 'u32[144,128]{1,0:T(1,128)}', space=vmem, size = 0x12000, scoped, tag = 'internal scratch']
  %s0 = inlined_call_operand.vmem [shape: bf16[8,512], index: 0, kind: input, shape index: {}]
  %s1 = inlined_call_operand.vmem [shape: f32[8,512], index: 1, kind: input, shape index: {}]
  %s2 = inlined_call_operand.vmem [shape: bf16[32,8], index: 2, kind: input, shape index: {}]
  %s3 = inlined_call_operand.vmem [shape: f32[32,1], index: 3, kind: input, shape index: {}]
  %s4 = inlined_call_operand.vmem [shape: bf16[32,32], index: 4, kind: input, shape index: {}]
  %s5 = inlined_call_operand.vmem [shape: f32[32,1], index: 5, kind: input, shape index: {}]
  %s6 = inlined_call_operand.vmem [shape: bf16[8,32], index: 6, kind: input, shape index: {}]
  %s7 = inlined_call_operand.vmem [shape: f32[8,1], index: 7, kind: input, shape index: {}]
  %s8 = inlined_call_operand.vmem [shape: f32[8,1], index: 8, kind: input, shape index: {}]
  %s9 = inlined_call_operand.vmem [shape: f32[8,1], index: 9, kind: input, shape index: {}]
  %s10 = inlined_call_operand.vmem [shape: f32[16,512], index: 10, kind: output, shape index: {}]
  %s11 = sld [smem:[#allocation0]]
  $region92: #{simi_forward_feature_major.1} parent=0
    _
  %s13 = ssub.s32 1, %s11
  %s14 = scalar_select 0, %s13, %s11
  $region1: #{simi_forward_feature_major.1} parent=0
    #allocation2 [shape = 'u8[32768]{0}', space=vmem, size = 0x8000, scoped, tag = 'output window, operand 0']
    loop: start=0, step=1, limit=4
    $region2: #{simi_forward_feature_major.1} parent=1 // loop_pre_header
      _
    $region3: #{simi_forward_feature_major.1} parent=1 // loop_header
      %s16 = sphi 0, %s20
      %p17 = scmp.ge.s32.totalorder %s16, 4
      %s26 = sphi 0, %s28
      %s29 = sphi 0, %s26
      %s30 = sphi 0, %s29
      %s46 = sphi 0, %s30
      %s52 = sphi 0, %s54
      %s55 = sphi 0, %s52
      %s56 = sphi 0, %s55
      %s72 = sphi 0, %s56
      %s76 = sphi 0, %s76
      %s78 = sphi 0, %s76
      %s79 = sphi 0, %s78
      %s93 = sphi 0, %s79
      %s97 = sphi 0, %s97
      %s99 = sphi 0, %s97
      %s100 = sphi 0, %s99
      %s114 = sphi 0, %s100
      %s118 = sphi 0, %s118
      %s120 = sphi 0, %s118
      %s121 = sphi 0, %s120
      %s135 = sphi 0, %s121
      %s139 = sphi 0, %s139
      %s141 = sphi 0, %s139
      %s142 = sphi 0, %s141
      %s156 = sphi 0, %s142
      %s160 = sphi 0, %s160
      %s162 = sphi 0, %s160
      %s163 = sphi 0, %s162
      %s177 = sphi 0, %s163
      %s181 = sphi 0, %s181
      %s183 = sphi 0, %s181
      %s184 = sphi 0, %s183
      %s198 = sphi 0, %s184
      %s202 = sphi 0, %s202
      %s204 = sphi 0, %s202
      %s205 = sphi 0, %s204
      %s219 = sphi 0, %s205
      %s223 = sphi 0, %s223
      %s225 = sphi 0, %s223
      %s226 = sphi 0, %s225
      %s240 = sphi 0, %s226
      %s246 = sphi 0, %s248
      %s249 = sphi 0, %s246
      %s250 = sphi 0, %s249
      %s266 = sphi 0, %s250
    $region4: #{simi_forward_feature_major.1} parent=1 // loop_header_branch
      %19 = sbr.rel (%p17) target = $region8
    $region5: #{simi_forward_feature_major.1} parent=1 // loop_body
      %s21 = ssub.s32 %s16, 1
      %s22 = ssub.s32 %s16, 2
      %s23 = sadd.s32 %s16, 1
      %s24 = ssub.s32 %s16, %s23
      %p25 = scmp.eq.s32.totalorder %s24, 0
      %s27 = sadd.s32 %s26, 1
      %s28 = scalar_select %p25, %s26, %s27
      %p31 = pneg %p25
      %p32 = scmp.eq.s32.totalorder %s16, 1
      %p33 = por %p31, %p32
      %p34 = scmp.ne.s32.totalorder %s26, %s29
      %p35 = scmp.eq.s32.totalorder %s16, 0
      %p36 = por %p34, %p35
      %p37 = scmp.ne.s32.totalorder %s26, %s29
      %p38 = scmp.eq.s32.totalorder %s21, 1
      %p39 = por %p37, %p38
      %p40 = scmp.ne.s32.totalorder %s29, %s30
      %p41 = scmp.eq.s32.totalorder %s21, 0
      %p42 = por %p40, %p41
      %p43 = scmp.ne.s32.totalorder %s29, %s30
      %p44 = scmp.eq.s32.totalorder %s22, 1
      %p45 = por %p43, %p44
      %p47 = scmp.ne.s32.totalorder %s30, %s46
      %p48 = scmp.eq.s32.totalorder %s22, 0
      %p49 = por %p47, %p48
      %s50 = ssub.s32 %s16, %s23
      %p51 = scmp.eq.s32.totalorder %s50, 0
      %s53 = sadd.s32 %s52, 1
      %s54 = scalar_select %p51, %s52, %s53
      %p57 = pneg %p51
      %p58 = scmp.eq.s32.totalorder %s16, 1
      %p59 = por %p57, %p58
      %p60 = scmp.ne.s32.totalorder %s52, %s55
      %p61 = scmp.eq.s32.totalorder %s16, 0
      %p62 = por %p60, %p61
      %p63 = scmp.ne.s32.totalorder %s52, %s55
      %p64 = scmp.eq.s32.totalorder %s21, 1
      %p65 = por %p63, %p64
      %p66 = scmp.ne.s32.totalorder %s55, %s56
      %p67 = scmp.eq.s32.totalorder %s21, 0
      %p68 = por %p66, %p67
      %p69 = scmp.ne.s32.totalorder %s55, %s56
      %p70 = scmp.eq.s32.totalorder %s22, 1
      %p71 = por %p69, %p70
      %p73 = scmp.ne.s32.totalorder %s56, %s72
      %p74 = scmp.eq.s32.totalorder %s22, 0
      %p75 = por %p73, %p74
      %s77 = sadd.s32 %s76, 1
      %p80 = scmp.eq.s32.totalorder %s16, 1
      %p81 = scmp.ne.s32.totalorder %s76, %s78
      %p82 = scmp.eq.s32.totalorder %s16, 0
      %p83 = por %p81, %p82
      %p84 = scmp.ne.s32.totalorder %s76, %s78
      %p85 = scmp.eq.s32.totalorder %s21, 1
      %p86 = por %p84, %p85
      %p87 = scmp.ne.s32.totalorder %s78, %s79
      %p88 = scmp.eq.s32.totalorder %s21, 0
      %p89 = por %p87, %p88
      %p90 = scmp.ne.s32.totalorder %s78, %s79
      %p91 = scmp.eq.s32.totalorder %s22, 1
      %p92 = por %p90, %p91
      %p94 = scmp.ne.s32.totalorder %s79, %s93
      %p95 = scmp.eq.s32.totalorder %s22, 0
      %p96 = por %p94, %p95
      %s98 = sadd.s32 %s97, 1
      %p101 = scmp.eq.s32.totalorder %s16, 1
      %p102 = scmp.ne.s32.totalorder %s97, %s99
      %p103 = scmp.eq.s32.totalorder %s16, 0
      %p104 = por %p102, %p103
      %p105 = scmp.ne.s32.totalorder %s97, %s99
      %p106 = scmp.eq.s32.totalorder %s21, 1
      %p107 = por %p105, %p106
      %p108 = scmp.ne.s32.totalorder %s99, %s100
      %p109 = scmp.eq.s32.totalorder %s21, 0
      %p110 = por %p108, %p109
      %p111 = scmp.ne.s32.totalorder %s99, %s100
      %p112 = scmp.eq.s32.totalorder %s22, 1
      %p113 = por %p111, %p112
      %p115 = scmp.ne.s32.totalorder %s100, %s114
      %p116 = scmp.eq.s32.totalorder %s22, 0
      %p117 = por %p115, %p116
      %s119 = sadd.s32 %s118, 1
      %p122 = scmp.eq.s32.totalorder %s16, 1
      %p123 = scmp.ne.s32.totalorder %s118, %s120
      %p124 = scmp.eq.s32.totalorder %s16, 0
      %p125 = por %p123, %p124
      %p126 = scmp.ne.s32.totalorder %s118, %s120
      %p127 = scmp.eq.s32.totalorder %s21, 1
      %p128 = por %p126, %p127
      %p129 = scmp.ne.s32.totalorder %s120, %s121
      %p130 = scmp.eq.s32.totalorder %s21, 0
      %p131 = por %p129, %p130
      %p132 = scmp.ne.s32.totalorder %s120, %s121
      %p133 = scmp.eq.s32.totalorder %s22, 1
      %p134 = por %p132, %p133
      %p136 = scmp.ne.s32.totalorder %s121, %s135
      %p137 = scmp.eq.s32.totalorder %s22, 0
      %p138 = por %p136, %p137
      %s140 = sadd.s32 %s139, 1
      %p143 = scmp.eq.s32.totalorder %s16, 1
      %p144 = scmp.ne.s32.totalorder %s139, %s141
      %p145 = scmp.eq.s32.totalorder %s16, 0
      %p146 = por %p144, %p145
      %p147 = scmp.ne.s32.totalorder %s139, %s141
      %p148 = scmp.eq.s32.totalorder %s21, 1
      %p149 = por %p147, %p148
      %p150 = scmp.ne.s32.totalorder %s141, %s142
      %p151 = scmp.eq.s32.totalorder %s21, 0
      %p152 = por %p150, %p151
      %p153 = scmp.ne.s32.totalorder %s141, %s142
      %p154 = scmp.eq.s32.totalorder %s22, 1
      %p155 = por %p153, %p154
      %p157 = scmp.ne.s32.totalorder %s142, %s156
      %p158 = scmp.eq.s32.totalorder %s22, 0
      %p159 = por %p157, %p158
      %s161 = sadd.s32 %s160, 1
      %p164 = scmp.eq.s32.totalorder %s16, 1
      %p165 = scmp.ne.s32.totalorder %s160, %s162
      %p166 = scmp.eq.s32.totalorder %s16, 0
      %p167 = por %p165, %p166
      %p168 = scmp.ne.s32.totalorder %s160, %s162
      %p169 = scmp.eq.s32.totalorder %s21, 1
      %p170 = por %p168, %p169
      %p171 = scmp.ne.s32.totalorder %s162, %s163
      %p172 = scmp.eq.s32.totalorder %s21, 0
      %p173 = por %p171, %p172
      %p174 = scmp.ne.s32.totalorder %s162, %s163
      %p175 = scmp.eq.s32.totalorder %s22, 1
      %p176 = por %p174, %p175
      %p178 = scmp.ne.s32.totalorder %s163, %s177
      %p179 = scmp.eq.s32.totalorder %s22, 0
      %p180 = por %p178, %p179
      %s182 = sadd.s32 %s181, 1
      %p185 = scmp.eq.s32.totalorder %s16, 1
      %p186 = scmp.ne.s32.totalorder %s181, %s183
      %p187 = scmp.eq.s32.totalorder %s16, 0
      %p188 = por %p186, %p187
      %p189 = scmp.ne.s32.totalorder %s181, %s183
      %p190 = scmp.eq.s32.totalorder %s21, 1
      %p191 = por %p189, %p190
      %p192 = scmp.ne.s32.totalorder %s183, %s184
      %p193 = scmp.eq.s32.totalorder %s21, 0
      %p194 = por %p192, %p193
      %p195 = scmp.ne.s32.totalorder %s183, %s184
      %p196 = scmp.eq.s32.totalorder %s22, 1
      %p197 = por %p195, %p196
      %p199 = scmp.ne.s32.totalorder %s184, %s198
      %p200 = scmp.eq.s32.totalorder %s22, 0
      %p201 = por %p199, %p200
      %s203 = sadd.s32 %s202, 1
      %p206 = scmp.eq.s32.totalorder %s16, 1
      %p207 = scmp.ne.s32.totalorder %s202, %s204
      %p208 = scmp.eq.s32.totalorder %s16, 0
      %p209 = por %p207, %p208
      %p210 = scmp.ne.s32.totalorder %s202, %s204
      %p211 = scmp.eq.s32.totalorder %s21, 1
      %p212 = por %p210, %p211
      %p213 = scmp.ne.s32.totalorder %s204, %s205
      %p214 = scmp.eq.s32.totalorder %s21, 0
      %p215 = por %p213, %p214
      %p216 = scmp.ne.s32.totalorder %s204, %s205
      %p217 = scmp.eq.s32.totalorder %s22, 1
      %p218 = por %p216, %p217
      %p220 = scmp.ne.s32.totalorder %s205, %s219
      %p221 = scmp.eq.s32.totalorder %s22, 0
      %p222 = por %p220, %p221
      %s224 = sadd.s32 %s223, 1
      %p227 = scmp.eq.s32.totalorder %s16, 1
      %p228 = scmp.ne.s32.totalorder %s223, %s225
      %p229 = scmp.eq.s32.totalorder %s16, 0
      %p230 = por %p228, %p229
      %p231 = scmp.ne.s32.totalorder %s223, %s225
      %p232 = scmp.eq.s32.totalorder %s21, 1
      %p233 = por %p231, %p232
      %p234 = scmp.ne.s32.totalorder %s225, %s226
      %p235 = scmp.eq.s32.totalorder %s21, 0
      %p236 = por %p234, %p235
      %p237 = scmp.ne.s32.totalorder %s225, %s226
      %p238 = scmp.eq.s32.totalorder %s22, 1
      %p239 = por %p237, %p238
      %p241 = scmp.ne.s32.totalorder %s226, %s240
      %p242 = scmp.eq.s32.totalorder %s22, 0
      %p243 = por %p241, %p242
      %s244 = ssub.s32 %s16, %s23
      %p245 = scmp.eq.s32.totalorder %s244, 0
      %s247 = sadd.s32 %s246, 1
      %s248 = scalar_select %p245, %s246, %s247
      %p251 = pneg %p245
      %p252 = scmp.eq.s32.totalorder %s16, 1
      %p253 = por %p251, %p252
      %p254 = scmp.ne.s32.totalorder %s246, %s249
      %p255 = scmp.eq.s32.totalorder %s16, 0
      %p256 = por %p254, %p255
      %p257 = scmp.ne.s32.totalorder %s246, %s249
      %p258 = scmp.eq.s32.totalorder %s21, 1
      %p259 = por %p257, %p258
      %p260 = scmp.ne.s32.totalorder %s249, %s250
      %p261 = scmp.eq.s32.totalorder %s21, 0
      %p262 = por %p260, %p261
      %p263 = scmp.ne.s32.totalorder %s249, %s250
      %p264 = scmp.eq.s32.totalorder %s22, 1
      %p265 = por %p263, %p264
      %p267 = scmp.ne.s32.totalorder %s250, %s266
      %p268 = scmp.eq.s32.totalorder %s22, 0
      %p269 = por %p267, %p268
      %p270 = scmp.le.s32.totalorder 1, %s16
      %p271 = scmp.lt.s32.totalorder %s16, 3
      %p272 = pnand %p270, %p271
      %p273 = pneg %p272
      // Predicated region
      $region9: #{simi_forward_feature_major.1} parent=5 // pred_check
        _
      $region10: #{simi_forward_feature_major.1} parent=5 // pred_check_branch
        %275 = sbr.rel (%p272) target = $region12
      $region11: #{simi_forward_feature_major.1} parent=5 // pred_region
        %s276 = ssub.s32 %s16, 1
        // Predicated region
        $region13: #{simi_forward_feature_major.1} parent=11 // pred_check
          %p277 = pneg %p89
        $region14: #{simi_forward_feature_major.1} parent=11 // pred_check_branch
          %279 = sbr.rel (%p277) target = $region16
        $region15: #{simi_forward_feature_major.1} parent=11 // pred_region
          _
        $region16: #{simi_forward_feature_major.1} parent=11 // pred_fallthru
          _
        // Predicated region
        $region17: #{simi_forward_feature_major.1} parent=11 // pred_check
          %p280 = pneg %p110
        $region18: #{simi_forward_feature_major.1} parent=11 // pred_check_branch
          %282 = sbr.rel (%p280) target = $region20
        $region19: #{simi_forward_feature_major.1} parent=11 // pred_region
          _
        $region20: #{simi_forward_feature_major.1} parent=11 // pred_fallthru
          _
        // Predicated region
        $region21: #{simi_forward_feature_major.1} parent=11 // pred_check
          %p283 = pneg %p131
        $region22: #{simi_forward_feature_major.1} parent=11 // pred_check_branch
          %285 = sbr.rel (%p283) target = $region24
        $region23: #{simi_forward_feature_major.1} parent=11 // pred_region
          _
        $region24: #{simi_forward_feature_major.1} parent=11 // pred_fallthru
          _
        // Predicated region
        $region25: #{simi_forward_feature_major.1} parent=11 // pred_check
          %p286 = pneg %p152
        $region26: #{simi_forward_feature_major.1} parent=11 // pred_check_branch
          %288 = sbr.rel (%p286) target = $region28
        $region27: #{simi_forward_feature_major.1} parent=11 // pred_region
          _
        $region28: #{simi_forward_feature_major.1} parent=11 // pred_fallthru
          _
        // Predicated region
        $region29: #{simi_forward_feature_major.1} parent=11 // pred_check
          %p289 = pneg %p173
        $region30: #{simi_forward_feature_major.1} parent=11 // pred_check_branch
          %291 = sbr.rel (%p289) target = $region32
        $region31: #{simi_forward_feature_major.1} parent=11 // pred_region
          _
        $region32: #{simi_forward_feature_major.1} parent=11 // pred_fallthru
          _
        // Predicated region
        $region33: #{simi_forward_feature_major.1} parent=11 // pred_check
          %p292 = pneg %p194
        $region34: #{simi_forward_feature_major.1} parent=11 // pred_check_branch
          %294 = sbr.rel (%p292) target = $region36
        $region35: #{simi_forward_feature_major.1} parent=11 // pred_region
          _
        $region36: #{simi_forward_feature_major.1} parent=11 // pred_fallthru
          _
        // Predicated region
        $region37: #{simi_forward_feature_major.1} parent=11 // pred_check
          %p295 = pneg %p215
        $region38: #{simi_forward_feature_major.1} parent=11 // pred_check_branch
          %297 = sbr.rel (%p295) target = $region40
        $region39: #{simi_forward_feature_major.1} parent=11 // pred_region
          _
        $region40: #{simi_forward_feature_major.1} parent=11 // pred_fallthru
          _
        // Predicated region
        $region41: #{simi_forward_feature_major.1} parent=11 // pred_check
          %p298 = pneg %p236
        $region42: #{simi_forward_feature_major.1} parent=11 // pred_check_branch
          %300 = sbr.rel (%p298) target = $region44
        $region43: #{simi_forward_feature_major.1} parent=11 // pred_region
          _
        $region44: #{simi_forward_feature_major.1} parent=11 // pred_fallthru
          _
      $region12: #{simi_forward_feature_major.1} parent=5 // pred_fallthru
        _
      %p301 = scmp.lt.s32.totalorder %s16, 2
      // Predicated region
      $region45: #{simi_forward_feature_major.1} parent=5 // pred_check
        %p302 = pneg %p301
      $region46: #{simi_forward_feature_major.1} parent=5 // pred_check_branch
        %304 = sbr.rel (%p302) target = $region48
      $region47: #{simi_forward_feature_major.1} parent=5 // pred_region
        // Predicated region
        $region49: #{simi_forward_feature_major.1} parent=47 // pred_check
          %p305 = pneg %p36
        $region50: #{simi_forward_feature_major.1} parent=47 // pred_check_branch
          %307 = sbr.rel (%p305) target = $region52
        $region51: #{simi_forward_feature_major.1} parent=47 // pred_region
          %s308 = smul.u32 2, %s16
          %p309 = scmp.lt.s32.totalorder %s308, 3
          %s310 = scalar_select %p309, %s308, 3
          %s311 = smul.addr %s310, 4
          %s312 = scalar_lea.vmem %s0, %s311
          %s313 = smul.u32 2, %s16
        $region52: #{simi_forward_feature_major.1} parent=47 // pred_fallthru
          _
        // Predicated region
        $region53: #{simi_forward_feature_major.1} parent=47 // pred_check
          %p314 = pneg %p62
        $region54: #{simi_forward_feature_major.1} parent=47 // pred_check_branch
          %316 = sbr.rel (%p314) target = $region56
        $region55: #{simi_forward_feature_major.1} parent=47 // pred_region
          %s317 = smul.u32 2, %s16
          %p318 = scmp.lt.s32.totalorder %s317, 3
          %s319 = scalar_select %p318, %s317, 3
          %s320 = smul.addr %s319, 8
          %s321 = scalar_lea.vmem %s1, %s320
          %s322 = smul.u32 2, %s16
        $region56: #{simi_forward_feature_major.1} parent=47 // pred_fallthru
          _
      $region48: #{simi_forward_feature_major.1} parent=5 // pred_fallthru
        _
      %p323 = scmp.le.s32.totalorder 1, %s16
      %p324 = scmp.lt.s32.totalorder %s16, 3
      %p325 = pnand %p323, %p324
      %p326 = pneg %p325
      // Predicated region
      $region57: #{simi_forward_feature_major.1} parent=5 // pred_check
        _
      $region58: #{simi_forward_feature_major.1} parent=5 // pred_check_branch
        %328 = sbr.rel (%p325) target = $region60
      $region59: #{simi_forward_feature_major.1} parent=5 // pred_region
        %s329 = ssub.s32 %s16, 1
        %s330 = smul.u32 2, %s21
        %p331 = scmp.lt.s32.totalorder %s330, 3
        %s332 = scalar_select %p331, %s330, 3
        %s333 = smul.addr %s332, 4
        %s334 = scalar_lea.vmem %s0, %s333
        %p335 = pneg %p42
        %p336 = pneg %p39
        %s337 = smul.u32 2, %s21
        %p338 = scmp.lt.s32.totalorder %s337, 3
        %s339 = scalar_select %p338, %s337, 3
        %s340 = smul.addr %s339, 8
        %s341 = scalar_lea.vmem %s1, %s340
        %p342 = pneg %p68
        %p343 = pneg %p65
        %p344 = pneg %p89
        %p345 = pneg %p86
        %p346 = pneg %p110
        %p347 = pneg %p107
        %p348 = pneg %p131
        %p349 = pneg %p128
        %p350 = pneg %p152
        %p351 = pneg %p149
        %p352 = pneg %p173
        %p353 = pneg %p170
        %p354 = pneg %p194
        %p355 = pneg %p191
        %p356 = pneg %p215
        %p357 = pneg %p212
        %p358 = pneg %p236
        %p359 = pneg %p233
        %p360 = pneg %p262
        %p361 = pneg %p259
        %s362 = sand.u32 %s249, 1
        %s363 = sand.u32 %s249, 1
        %s364 = smul.addr %s363, 32
        %s365 = scalar_lea.vmem [#allocation2], %s364
        %s366 = smul.u32 2, %s21
        %p367 = scmp.lt.s32.totalorder %s366, 3
        %s368 = scalar_select %p367, %s366, 3
        %s369 = smul.addr %s368, 4
        %s370 = scalar_lea.vmem %s0, %s369
        %s371 = smul.u32 2, %s21
        %s372 = smul.u32 2, %s21
        %p373 = scmp.lt.s32.totalorder %s372, 3
        %s374 = scalar_select %p373, %s372, 3
        %s375 = smul.addr %s374, 8
        %s376 = scalar_lea.vmem %s1, %s375
        %s377 = smul.u32 2, %s21
        %s378 = smul.u32 2, %s21
        %v380 = vld [vmem:[%s370] sm:$0xff]
        %v381 = vld [vmem:[%s2] sm:$0xf]
        %v382 = vld [vmem:[%s2 + $0x4] sm:$0xf]
        %v383 = vld [vmem:[%s2 + $0x8] sm:$0xf]
        %v384 = vld [vmem:[%s2 + $0xc] sm:$0xf]
        %v385 = vld [vmem:[%s3] sm:$0xff]
        %v386 = vld [vmem:[%s3 + $0x8] sm:$0xff]
        %v387 = vld [vmem:[%s3 + $0x10] sm:$0xff]
        %v388 = vld [vmem:[%s3 + $0x18] sm:$0xff]
        %390 = vset.pattern.permute.xlu0 0
        %391 = vperm.xlu0 %390, %v385
        %v392 = vpop.permute.xlu0 %391
        %395 = vset.pattern.permute.xlu0 0
        %396 = vperm.xlu0 %395, %v386
        %v397 = vpop.permute.xlu0 %396
        %400 = vset.pattern.permute.xlu0 0
        %401 = vperm.xlu0 %400, %v387
        %v402 = vpop.permute.xlu0 %401
        %405 = vset.pattern.permute.xlu0 0
        %406 = vperm.xlu0 %405, %v388
        %v407 = vpop.permute.xlu0 %406
        %v413 = vunpack.c.l.b16 %v381
        %v414 = vunpack.c.l.b16 %v382
        %v415 = vunpack.c.l.b16 %v383
        %v416 = vunpack.c.l.b16 %v384
        %v417 = vpack.c.b16 %v414, %v413
        %v418 = vpack.c.b16 %v416, %v415
        %v420 = vunpack.c.l.b16 %v380
        %v421 = vunpack.c.h.b16 %v380
        %v422 = vpack.c.b16 %v420, %v420
        %v423 = vpack.c.b16 %v421, %v421
        %vm424 = vcmask 64512
        %v426 = vsel %vm424, %v417, 0
        %v429 = vsel %vm424, %v418, 0
        %vm431 = vcmask 1043456
        %v433 = vsel %vm431, %v422, 0
        %v436 = vsel %vm431, %v423, 0
        %438 = vmatprep.subr.bf16.mxu0 0
        %439 = vmatpush1.bf16.msra.mxu0 0
        %440 = vmatprep.subr.bf16.mxu0 0
        %441 = vmatpush1.bf16.msra.mxu0 0
        %442 = vmatprep.subr.bf16.mxu0 0
        %443 = vmatpush1.bf16.msra.mxu0 0
        %444 = vmatprep.subr.bf16.mxu0 0
        %445 = vmatpush1.bf16.msra.mxu0 0
        %446 = vmatprep.subr.bf16.mxu0 0
        %447 = vmatpush1.bf16.msra.mxu0 0
        %448 = vmatprep.subr.bf16.mxu0 0
        %449 = vmatpush1.bf16.msra.mxu0 0
        %450 = vmatprep.subr.bf16.mxu0 0
        %451 = vmatpush1.bf16.msra.mxu0 0
        %452 = vmatprep.subr.bf16.mxu0 %v436
        %453 = vmatpush1.bf16.msra.mxu0 %v433
        %454 = vmatprep.subr.bf16.mxu0 0
        %455 = vmatpush2.bf16.msra.mxu0 0
        %456 = vmatprep.subr.bf16.mxu0 0
        %457 = vmatpush2.bf16.msra.mxu0 0
        %458 = vmatprep.subr.bf16.mxu0 0
        %459 = vmatpush2.bf16.msra.mxu0 0
        %460 = vmatprep.subr.bf16.mxu0 0
        %461 = vmatpush2.bf16.msra.mxu0 0
        %462 = vmatprep.subr.bf16.mxu0 0
        %463 = vmatpush2.bf16.msra.mxu0 0
        %464 = vmatprep.subr.bf16.mxu0 0
        %465 = vmatpush2.bf16.msra.mxu0 0
        %466 = vmatprep.subr.bf16.mxu0 0
        %467 = vmatpush2.bf16.msra.mxu0 0
        %468 = vmatprep.subr.bf16.mxu0 0
        %469 = vmatpush2.bf16.msra.mxu0 0
        %470 = vmatprep.mubr.bf16.mxu0 0
        %471 = vmatmul.mubr.bf16.gmra.mxu0 %v426
        %v472 = vpop.f32.mrf.mxu0
        %v473 = vadd.f32 %v392, %v472
        %v474 = vpop.f32.mrf.mxu0
        %v475 = vadd.f32 %v392, %v474
        %v476 = vpop.f32.mrf.mxu0
        %v477 = vadd.f32 %v397, %v476
        %v478 = vpop.f32.mrf.mxu0
        %v479 = vadd.f32 %v397, %v478
        %480 = vmatprep.mubr.bf16.mxu0 0
        %481 = vmatmul.mubr.bf16.gmra.mxu0 %v429
        %v482 = vpop.f32.mrf.mxu0
        %v483 = vadd.f32 %v402, %v482
        %v484 = vpop.f32.mrf.mxu0
        %v485 = vadd.f32 %v402, %v484
        %v486 = vpop.f32.mrf.mxu0
        %v487 = vadd.f32 %v407, %v486
        %v488 = vpop.f32.mrf.mxu0
        %v489 = vadd.f32 %v407, %v488
        %490 = vdwg.mxu0
        %v491 = vmax.f32 %v473, 0.0
        %v492 = vmax.f32 %v475, 0.0
        %v493 = vmax.f32 %v477, 0.0
        %v494 = vmax.f32 %v479, 0.0
        %v495 = vmax.f32 %v483, 0.0
        %v496 = vmax.f32 %v485, 0.0
        %v497 = vmax.f32 %v487, 0.0
        %v498 = vmax.f32 %v489, 0.0
        %v499 = vld [vmem:[%s4] sm:$0xf]
        %v500 = vld [vmem:[%s4 + $0x4] sm:$0xf]
        %v501 = vld [vmem:[%s4 + $0x8] sm:$0xf]
        %v502 = vld [vmem:[%s4 + $0xc] sm:$0xf]
        %v503 = vpack.c.bf16 %v493, %v491
        %v504 = vpack.c.bf16 %v494, %v492
        %v505 = vpack.c.bf16 %v497, %v495
        %v506 = vpack.c.bf16 %v498, %v496
        %v507 = vld [vmem:[%s5] sm:$0xff]
        %v508 = vld [vmem:[%s5 + $0x8] sm:$0xff]
        %v509 = vld [vmem:[%s5 + $0x10] sm:$0xff]
        %v510 = vld [vmem:[%s5 + $0x18] sm:$0xff]
        %512 = vset.pattern.permute.xlu0 0
        %513 = vperm.xlu0 %512, %v507
        %v514 = vpop.permute.xlu0 %513
        %517 = vset.pattern.permute.xlu0 0
        %518 = vperm.xlu0 %517, %v508
        %v519 = vpop.permute.xlu0 %518
        %522 = vset.pattern.permute.xlu0 0
        %523 = vperm.xlu0 %522, %v509
        %v524 = vpop.permute.xlu0 %523
        %527 = vset.pattern.permute.xlu0 0
        %528 = vperm.xlu0 %527, %v510
        %v529 = vpop.permute.xlu0 %528
        %v535 = vunpack.c.l.b16 %v499
        %v536 = vunpack.c.l.b16 %v500
        %v537 = vunpack.c.l.b16 %v501
        %v538 = vunpack.c.l.b16 %v502
        %v539 = vpack.c.b16 %v536, %v535
        %v540 = vpack.c.b16 %v538, %v537
        %vm541 = vcmask 261120
        %v543 = vsel %vm541, %v539, 0
        %v546 = vsel %vm541, %v540, 0
        %548 = vmatprep.subr.bf16.mxu0 0
        %549 = vmatpush1.bf16.msra.mxu0 0
        %550 = vmatprep.subr.bf16.mxu0 0
        %551 = vmatpush1.bf16.msra.mxu0 0
        %552 = vmatprep.subr.bf16.mxu0 0
        %553 = vmatpush1.bf16.msra.mxu0 0
        %554 = vmatprep.subr.bf16.mxu0 0
        %555 = vmatpush1.bf16.msra.mxu0 0
        %556 = vmatprep.subr.bf16.mxu0 0
        %557 = vmatpush1.bf16.msra.mxu0 0
        %558 = vmatprep.subr.bf16.mxu0 0
        %559 = vmatpush1.bf16.msra.mxu0 0
        %560 = vmatprep.subr.bf16.mxu0 %v506
        %561 = vmatpush1.bf16.msra.mxu0 %v505
        %562 = vmatprep.subr.bf16.mxu0 %v504
        %563 = vmatpush1.bf16.msra.mxu0 %v503
        %564 = vmatprep.subr.bf16.mxu0 0
        %565 = vmatpush2.bf16.msra.mxu0 0
        %566 = vmatprep.subr.bf16.mxu0 0
        %567 = vmatpush2.bf16.msra.mxu0 0
        %568 = vmatprep.subr.bf16.mxu0 0
        %569 = vmatpush2.bf16.msra.mxu0 0
        %570 = vmatprep.subr.bf16.mxu0 0
        %571 = vmatpush2.bf16.msra.mxu0 0
        %572 = vmatprep.subr.bf16.mxu0 0
        %573 = vmatpush2.bf16.msra.mxu0 0
        %574 = vmatprep.subr.bf16.mxu0 0
        %575 = vmatpush2.bf16.msra.mxu0 0
        %576 = vmatprep.subr.bf16.mxu0 0
        %577 = vmatpush2.bf16.msra.mxu0 0
        %578 = vmatprep.subr.bf16.mxu0 0
        %579 = vmatpush2.bf16.msra.mxu0 0
        %580 = vmatprep.mubr.bf16.mxu0 0
        %581 = vmatmul.mubr.bf16.gmra.mxu0 %v543
        %v582 = vpop.f32.mrf.mxu0
        %v583 = vadd.f32 %v514, %v582
        %v584 = vpop.f32.mrf.mxu0
        %v585 = vadd.f32 %v514, %v584
        %v586 = vpop.f32.mrf.mxu0
        %v587 = vadd.f32 %v519, %v586
        %v588 = vpop.f32.mrf.mxu0
        %v589 = vadd.f32 %v519, %v588
        %590 = vmatprep.mubr.bf16.mxu0 0
        %591 = vmatmul.mubr.bf16.gmra.mxu0 %v546
        %v592 = vpop.f32.mrf.mxu0
        %v593 = vadd.f32 %v524, %v592
        %v594 = vpop.f32.mrf.mxu0
        %v595 = vadd.f32 %v524, %v594
        %v596 = vpop.f32.mrf.mxu0
        %v597 = vadd.f32 %v529, %v596
        %v598 = vpop.f32.mrf.mxu0
        %v599 = vadd.f32 %v529, %v598
        %600 = vdwg.mxu0
        %v601 = vmax.f32 %v583, 0.0
        %v602 = vmax.f32 %v585, 0.0
        %v603 = vmax.f32 %v587, 0.0
        %v604 = vmax.f32 %v589, 0.0
        %v605 = vmax.f32 %v593, 0.0
        %v606 = vmax.f32 %v595, 0.0
        %v607 = vmax.f32 %v597, 0.0
        %v608 = vmax.f32 %v599, 0.0
        %v609 = vld [vmem:[%s6] sm:$0xf]
        %v610 = vpack.c.bf16 %v603, %v601
        %v611 = vpack.c.bf16 %v604, %v602
        %v612 = vpack.c.bf16 %v607, %v605
        %v613 = vpack.c.bf16 %v608, %v606
        %v614 = vld [vmem:[%s7] sm:$0xff]
        %616 = vset.pattern.permute.xlu0 0
        %617 = vperm.xlu0 %616, %v614
        %v618 = vpop.permute.xlu0 %617
        %v621 = vsel %vm541, %v609, 0
        %623 = vmatprep.subr.bf16.mxu0 0
        %624 = vmatpush1.bf16.msra.mxu0 0
        %625 = vmatprep.subr.bf16.mxu0 0
        %626 = vmatpush1.bf16.msra.mxu0 0
        %627 = vmatprep.subr.bf16.mxu0 0
        %628 = vmatpush1.bf16.msra.mxu0 0
        %629 = vmatprep.subr.bf16.mxu0 0
        %630 = vmatpush1.bf16.msra.mxu0 0
        %631 = vmatprep.subr.bf16.mxu0 0
        %632 = vmatpush1.bf16.msra.mxu0 0
        %633 = vmatprep.subr.bf16.mxu0 0
        %634 = vmatpush1.bf16.msra.mxu0 0
        %635 = vmatprep.subr.bf16.mxu0 %v613
        %636 = vmatpush1.bf16.msra.mxu0 %v612
        %637 = vmatprep.subr.bf16.mxu0 %v611
        %638 = vmatpush1.bf16.msra.mxu0 %v610
        %639 = vmatprep.subr.bf16.mxu0 0
        %640 = vmatpush2.bf16.msra.mxu0 0
        %641 = vmatprep.subr.bf16.mxu0 0
        %642 = vmatpush2.bf16.msra.mxu0 0
        %643 = vmatprep.subr.bf16.mxu0 0
        %644 = vmatpush2.bf16.msra.mxu0 0
        %645 = vmatprep.subr.bf16.mxu0 0
        %646 = vmatpush2.bf16.msra.mxu0 0
        %647 = vmatprep.subr.bf16.mxu0 0
        %648 = vmatpush2.bf16.msra.mxu0 0
        %649 = vmatprep.subr.bf16.mxu0 0
        %650 = vmatpush2.bf16.msra.mxu0 0
        %651 = vmatprep.subr.bf16.mxu0 0
        %652 = vmatpush2.bf16.msra.mxu0 0
        %653 = vmatprep.subr.bf16.mxu0 0
        %654 = vmatpush2.bf16.msra.mxu0 0
        %655 = vmatprep.mubr.bf16.mxu0 0
        %656 = vmatmul.mubr.bf16.gmra.mxu0 %v621
        %v657 = vpop.f32.mrf.mxu0
        %v658 = vadd.f32 %v618, %v657
        %v659 = vpop.f32.mrf.mxu0
        %v660 = vadd.f32 %v618, %v659
        %v661 = vpop.f32.mrf.mxu0
        %v662 = vpop.f32.mrf.mxu0
        %663 = vdwg.mxu0
        %v664 = vld [vmem:[%s376] sm:$0xff]
        %v665 = vld [vmem:[%s376 + $0x8] sm:$0xff]
        %v666 = vld [vmem:[%s8] sm:$0xff]
        %668 = vset.pattern.permute.xlu0 0
        %669 = vperm.xlu0 %668, %v666
        %v670 = vpop.permute.xlu0 %669
        %v672 = vmul.f32 %v670, %v664
        %v673 = vmul.f32 %v670, %v665
        %v674 = vadd.f32 %v658, %v672
        %v675 = vadd.f32 %v660, %v673
        %676 = vst [vmem:[%s365] sm:$0xff] %v674
        %677 = vst [vmem:[%s365 + $0x8] sm:$0xff] %v675
        %v678 = vld [vmem:[%s9] sm:$0xff]
        %680 = vset.pattern.permute.xlu0 0
        %681 = vperm.xlu0 %680, %v678
        %v682 = vpop.permute.xlu0 %681
        %v684 = vmul.f32 %v664, %v682
        %v685 = vmul.f32 %v665, %v682
        %686 = vst [vmem:[%s365 + $0x10] sm:$0xff] %v684
        %687 = vst [vmem:[%s365 + $0x18] sm:$0xff] %v685
        %s688 = sand.u32 %s249, 1
        %s689 = sand.u32 %s249, 1
        %s690 = smul.addr %s689, 32
        %s691 = scalar_lea.vmem [#allocation2], %s690
        // Predicated region
        $region61: #{simi_forward_feature_major.1} parent=59 // pred_check
          %p692 = pneg %p259
        $region62: #{simi_forward_feature_major.1} parent=59 // pred_check_branch
          %694 = sbr.rel (%p692) target = $region64
        $region63: #{simi_forward_feature_major.1} parent=59 // pred_region
          %s695 = smul.u32 2, %s21
          %s696 = smul.addr %s695, 8
          %s697 = scalar_lea.vmem %s10, %s696
          // Predicated region
          $region65: #{simi_forward_feature_major.1} parent=63 // pred_check
            _
          $region66: #{simi_forward_feature_major.1} parent=63 // pred_check_branch
            %699 = sbr.rel (0) target = $region68
          $region67: #{simi_forward_feature_major.1} parent=63 // pred_region
            // Predicated region
            $region69: #{simi_forward_feature_major.1} parent=67 // pred_check
              _
            $region70: #{simi_forward_feature_major.1} parent=67 // pred_check_branch
              %701 = sbr.rel (0) target = $region72
            $region71: #{simi_forward_feature_major.1} parent=67 // pred_region
              loop: start=0, step=1, limit=1
              $region73: #{simi_forward_feature_major.1} parent=71 // loop_pre_header
                _
              $region74: #{simi_forward_feature_major.1} parent=71 // loop_header
                %s703 = sphi 0, %s707
                %p704 = scmp.ge.s32.totalorder %s703, 1
                %s708 = sphi %s691, %s691
                %s709 = sphi %s697, %s697
              $region75: #{simi_forward_feature_major.1} parent=71 // loop_header_branch
                %706 = sbr.rel (%p704) target = $region79
              $region76: #{simi_forward_feature_major.1} parent=71 // loop_body
                %v710 = vld [vmem:[%s708] sm:$0xff]
                %711 = vst [vmem:[%s709] sm:$0xff] %v710
                %v712 = vld [vmem:[%s708 + $0x8] sm:$0xff]
                %713 = vst [vmem:[%s709 + $0x8] sm:$0xff] %v712
                %v714 = vld [vmem:[%s708 + $0x10] sm:$0xff]
                %715 = vst [vmem:[%s709 + $0x20] sm:$0xff] %v714
                %v716 = vld [vmem:[%s708 + $0x18] sm:$0xff]
                %717 = vst [vmem:[%s709 + $0x28] sm:$0xff] %v716
              $region77: #{simi_forward_feature_major.1} parent=71 // loop_footer
                %s707 = sadd.s32 1, %s703
              $region78: #{simi_forward_feature_major.1} parent=71 // loop_footer_branch
                %702 = sbr.rel target = $region74
              $region79: #{simi_forward_feature_major.1} parent=71 // loop_exit
                _
            $region72: #{simi_forward_feature_major.1} parent=67 // pred_fallthru
              _
            // Predicated region
            $region80: #{simi_forward_feature_major.1} parent=67 // pred_check
              _
            $region81: #{simi_forward_feature_major.1} parent=67 // pred_check_branch
              %719 = sbr.rel target = $region83
            $region82: #{simi_forward_feature_major.1} parent=67 // pred_region
              _
            $region83: #{simi_forward_feature_major.1} parent=67 // pred_fallthru
              _
          $region68: #{simi_forward_feature_major.1} parent=63 // pred_fallthru
            _
          %720 = vnop
        $region64: #{simi_forward_feature_major.1} parent=59 // pred_fallthru
          _
      $region60: #{simi_forward_feature_major.1} parent=5 // pred_fallthru
        _
      %p721 = scmp.le.s32.totalorder 2, %s16
      // Predicated region
      $region84: #{simi_forward_feature_major.1} parent=5 // pred_check
        %p722 = pneg %p721
      $region85: #{simi_forward_feature_major.1} parent=5 // pred_check_branch
        %724 = sbr.rel (%p722) target = $region87
      $region86: #{simi_forward_feature_major.1} parent=5 // pred_region
        %s725 = ssub.s32 %s16, 2
        // Predicated region
        $region88: #{simi_forward_feature_major.1} parent=86 // pred_check
          %p726 = pneg %p265
        $region89: #{simi_forward_feature_major.1} parent=86 // pred_check_branch
          %728 = sbr.rel (%p726) target = $region91
        $region90: #{simi_forward_feature_major.1} parent=86 // pred_region
          %s729 = sand.u32 %s250, 1
          %s730 = sand.u32 %s250, 1
          %s731 = smul.addr %s730, 32
          %s732 = scalar_lea.vmem [#allocation2], %s731
        $region91: #{simi_forward_feature_major.1} parent=86 // pred_fallthru
          _
      $region87: #{simi_forward_feature_major.1} parent=5 // pred_fallthru
        _
    $region6: #{simi_forward_feature_major.1} parent=1 // loop_footer
      %s20 = sadd.s32 1, %s16
    $region7: #{simi_forward_feature_major.1} parent=1 // loop_footer_branch
      %15 = sbr.rel target = $region3
    $region8: #{simi_forward_feature_major.1} parent=1 // loop_exit
      _

</llo_original>
